<compile_context>
chip_gen: v6e
topology: v6e:2x2x1
jax: 0.10.0
libtpu: 0.0.40
codegen_flags: <defaults>
</compile_context>

<pallas_src>
import functools

import jax
import jax.numpy as jnp
from jax.experimental import pallas as pl
from jax.experimental.pallas import tpu as pltpu

NUM_CLASSES = 60


def _round_up(x, m):
    return ((x + m - 1) // m) * m


def _cls_head_kernel(x_ref, w_ref, b_ref, o_ref):
    # x_ref: [B_TILE, H]        CLS-token rows (f32 or bf16, encoder-native dtype)
    # w_ref: [H, C_PAD]   bf16  zero-padded classes (resident: constant index_map)
    # b_ref: [1, C_PAD]   f32   zero-padded classes
    # o_ref: [B_TILE, C_PAD] f32, lane-dense (C_PAD is a multiple of 128)
    x = x_ref[...]
    if x.dtype != jnp.bfloat16:          # static dtype check; no runtime cost
        x = x.astype(jnp.bfloat16)       # bf16 MXU inputs, f32 accumulate
    acc = jnp.dot(x, w_ref[...], preferred_element_type=jnp.float32)
    o_ref[...] = (acc + b_ref[...]).astype(o_ref.dtype)   # bias add in f32 (VPU)


def prepare_classifier_params(weight, bias):
    """One-time (model-load-time) parameter prep. Cache the result; do NOT
    rebuild per forward -- the pad/scatter would cost more than the matmul."""
    H, C = weight.shape
    C_PAD = _round_up(C, 128)   # 60 -> 128 only; 256 would double weight DMA for nothing
    w_pad = jnp.zeros((H, C_PAD), jnp.bfloat16).at[:, :C].set(
        weight.astype(jnp.bfloat16))
    b_pad = jnp.zeros((1, C_PAD), jnp.float32).at[:, :C].set(
        bias.astype(jnp.float32)[None, :])
    return w_pad, b_pad, C


def emotion_classifier_forward(hidden_states, w_pad, b_pad, num_classes,
                               *, max_b_tile=1024):
    """hidden_states: [B, S, H] (encoder last_hidden_state);
    w_pad/b_pad: from prepare_classifier_params(). Returns [B, num_classes] f32."""
    # CLS extraction in the wrapper: trivial slice, fuses with the encoder epilogue,
    # and guarantees a dense 2D block layout inside the kernel.
    cls = hidden_states[:, 0, :]
    B, H = cls.shape
    C_PAD = w_pad.shape[1]

    if B >= 512:
        # Large batch: >=2 grid steps so the "parallel" axis can shard across
        # v7x's 2 TensorCores (single TC on v5e/v6e; extra steps are harmless).
        B_TILE = min(_round_up(pl.cdiv(B, 2), 8), max_b_tile)
    else:
        # Collapse the grid to one step: the head is overhead/latency-bound.
        B_TILE = _round_up(B, 8)
    grid = (pl.cdiv(B, B_TILE),)

    # Explicit VMEM budget (double-buffered in/out tiles + resident params),
    # clamped well under v7x's 64 MiB physical VMEM.
    x_bytes = jnp.dtype(cls.dtype).itemsize
    vmem_budget = (2 * B_TILE * H * x_bytes          # CLS tiles (double buffer)
                   + 2 * H * C_PAD * 2               # weight (bf16)
                   + 2 * C_PAD * 4                   # bias (f32)
                   + 2 * B_TILE * C_PAD * 4)         # output tiles (f32)
    vmem_limit = int(min(max(2 * vmem_budget, 16 << 20), 48 << 20))

    cost = pl.CostEstimate(
        flops=2 * B * H * C_PAD,
        transcendentals=0,
        bytes_accessed=(B * H * x_bytes + H * C_PAD * 2
                        + C_PAD * 4 + B * C_PAD * 4))

    out = pl.pallas_call(
        _cls_head_kernel,
        out_shape=jax.ShapeDtypeStruct((B, C_PAD), jnp.float32),
        grid=grid,
        in_specs=[
            pl.BlockSpec((B_TILE, H), lambda i: (i, 0)),
            # Weight / bias resident across the batch grid (constant block index).
            pl.BlockSpec((H, C_PAD), lambda i: (0, 0)),
            pl.BlockSpec((1, C_PAD), lambda i: (0, 0)),
        ],
        out_specs=pl.BlockSpec((B_TILE, C_PAD), lambda i: (i, 0)),
        compiler_params=pltpu.CompilerParams(
            dimension_semantics=("parallel",),
            vmem_limit_bytes=vmem_limit,
        ),
        cost_estimate=cost,
    )(cls, w_pad, b_pad)

    # Padded class columns hold zeros; slice them off before any consumer.
    # (If argmax/softmax is ever fused in-kernel, pad with -inf instead.)
    return out[:, :num_classes]


if __name__ == "__main__":
    # Small shapes consistent with the module's forward:
    #   batch=2, seq=8, hidden=32, num_classes=60
    B, S, H = 2, 8, 32

    key = jax.random.PRNGKey(0)
    k_x, k_w, k_b = jax.random.split(key, 3)

    # TODO(synk): the upstream HuggingFace encoder has no clean Pallas
    # equivalent; this array stands in for its last_hidden_state output.
    hidden_states = jax.random.normal(k_x, (B, S, H), dtype=jnp.float32)

    # nn.Linear(H, 60) parameters (weight stored as [H, C] = torch weight.T).
    weight = jax.random.normal(k_w, (H, NUM_CLASSES), dtype=jnp.float32) * 0.02
    bias = jax.random.normal(k_b, (NUM_CLASSES,), dtype=jnp.float32) * 0.02

    # One-time parameter prep (model-load time), reused across every forward.
    w_pad, b_pad, C = prepare_classifier_params(weight, bias)
    w_pad, b_pad = jax.block_until_ready((w_pad, b_pad))

    fwd = jax.jit(functools.partial(emotion_classifier_forward, num_classes=C))
    logits = fwd(hidden_states, w_pad, b_pad)
    jax.block_until_ready(logits)
    assert logits.shape == (B, NUM_CLASSES)

    cls = hidden_states[:, 0, :]
    # Precision-matched reference (bf16-rounded MXU inputs, f32 accumulate).
    ref_bf16 = (cls.astype(jnp.bfloat16).astype(jnp.float32)
                @ weight.astype(jnp.bfloat16).astype(jnp.float32)) + bias
    assert jnp.allclose(logits, ref_bf16, atol=1e-4, rtol=1e-4)
    # Semantic check against the full-f32 reference (bf16 cast error only).
    ref_f32 = cls @ weight + bias
    assert jnp.allclose(logits, ref_f32, atol=2e-2, rtol=2e-2)

    print("KERNEL_OK")
</pallas_src>

<mosaic_0001>
module attributes {stable_mosaic.version = 11 : i64} {
  func.func @_cls_head_kernel(%arg0: i32, %arg1: memref<8x32xf32, #tpu.memory_space<vmem>>, %arg2: memref<32x128xbf16, #tpu.memory_space<vmem>>, %arg3: memref<1x128xf32, #tpu.memory_space<vmem>>, %arg4: memref<8x128xf32, #tpu.memory_space<vmem>>) attributes {dimension_semantics = [#tpu.dimension_semantics<parallel>], iteration_bounds = array<i64: 1>, scalar_prefetch = 0 : i64, scratch_operands = 0 : i64, tpu.core_type = #tpu.core_type<tc>, window_params = [{transform_indices = @transform_0, window_bounds = array<i64: 8, 32>}, {pipeline_mode = #tpu.pipeline_mode<synchronous>, transform_indices = @transform_1, window_bounds = array<i64: 32, 128>}, {pipeline_mode = #tpu.pipeline_mode<synchronous>, transform_indices = @transform_2, window_bounds = array<i64: 1, 128>}, {transform_indices = @transform_3, window_bounds = array<i64: 8, 128>}]} {
    %c0 = arith.constant 0 : index
    %c0_0 = arith.constant 0 : index
    %0 = vector.load %arg1[%c0, %c0_0] : memref<8x32xf32, #tpu.memory_space<vmem>>, vector<8x32xf32>
    %1 = arith.truncf %0 : vector<8x32xf32> to vector<8x32xbf16>
    %c0_1 = arith.constant 0 : index
    %c0_2 = arith.constant 0 : index
    %2 = vector.load %arg2[%c0_1, %c0_2] : memref<32x128xbf16, #tpu.memory_space<vmem>>, vector<32x128xbf16>
    %cst = arith.constant dense<0.000000e+00> : vector<8x128xf32>
    %3 = tpu.matmul %1, %2, %cst {dimension_numbers = #tpu.dot_dimension_numbers<[1], [0], [0], [1], [0, 0, 1, 1], [], []>} : vector<8x32xbf16>, vector<32x128xbf16>, vector<8x128xf32> -> vector<8x128xf32>
    %c0_3 = arith.constant 0 : index
    %c0_4 = arith.constant 0 : index
    %4 = vector.load %arg3[%c0_3, %c0_4] : memref<1x128xf32, #tpu.memory_space<vmem>>, vector<1x128xf32>
    %5 = vector.broadcast %4 : vector<1x128xf32> to vector<8x128xf32>
    %6 = arith.addf %3, %5 : vector<8x128xf32>
    %c0_5 = arith.constant 0 : index
    %c0_6 = arith.constant 0 : index
    %7 = vector.load %arg4[%c0_5, %c0_6] : memref<8x128xf32, #tpu.memory_space<vmem>>, vector<8x128xf32>
    tpu.vector_store %arg4[%c0_5, %c0_6], %6 {strides = array<i32>} : memref<8x128xf32, #tpu.memory_space<vmem>>, vector<8x128xf32>,
    return
  }
  func.func @transform_0(%arg0: i32) -> (i32, i32) {
    %c0_i32 = arith.constant 0 : i32
    %c0_i32_0 = arith.constant 0 : i32
    return %arg0, %c0_i32 : i32, i32
  }
  func.func @transform_1(%arg0: i32) -> (i32, i32) {
    %c0_i32 = arith.constant 0 : i32
    %c0_i32_0 = arith.constant 0 : i32
    %c0_i32_1 = arith.constant 0 : i32
    return %c0_i32, %c0_i32_0 : i32, i32
  }
  func.func @transform_2(%arg0: i32) -> (i32, i32) {
    %c0_i32 = arith.constant 0 : i32
    %c0_i32_0 = arith.constant 0 : i32
    %c0_i32_1 = arith.constant 0 : i32
    return %c0_i32, %c0_i32_0 : i32, i32
  }
  func.func @transform_3(%arg0: i32) -> (i32, i32) {
    %c0_i32 = arith.constant 0 : i32
    %c0_i32_0 = arith.constant 0 : i32
    return %arg0, %c0_i32 : i32, i32
  }
}

</mosaic_0001>

<llo_original>
// kernel: emotion_classifier_forward.1
$region0: #{emotion_classifier_forward.1}
  #allocation0 [shape = 'u32[]', space=smem, size = 0x4, offset = 0x4, fixed_abs, tag = 'smem constant byte address 0x4 - core index']
  #allocation1 [shape = 'u32[144,128]{1,0:T(1,128)}', space=vmem, size = 0x12000, scoped, tag = 'internal scratch']
  %s0 = inlined_call_operand.vmem [shape: f32[2,32], index: 0, kind: input, shape index: {}]
  %s1 = inlined_call_operand.hbm [shape: bf16[32,128], index: 1, kind: input, shape index: {}]
  %s2 = inlined_call_operand.vmem [shape: f32[1,128], index: 2, kind: input, shape index: {}]
  %s3 = inlined_call_operand.hbm [shape: f32[2,128], index: 3, kind: output, shape index: {}]
  %s4 = sld [smem:[#allocation0]]
  $region26: #{emotion_classifier_forward.1} parent=0
    _
  %s6 = ssub.s32 1, %s4
  %s7 = scalar_select 0, %s6, %s4
  $region1: #{emotion_classifier_forward.1} parent=0
    #allocation2 [shape = 'u8[8192]{0}', space=vmem, size = 0x2000, scoped, tag = 'input window, operand 1, single buffered']
    #allocation3 [shape = 's32[1]{0}', space=sflag, size = 0x4, scoped, tag = 'scoped memory for emotion_classifier_forward.1']
    #allocation4 [shape = 's32[1]{0}', space=sflag, size = 0x4, scoped, tag = 'scoped memory for emotion_classifier_forward.1']
    #allocation5 [shape = 'u8[4096]{0}', space=vmem, size = 0x1000, scoped, tag = 'output window, operand 0, single buffered']
    %8 = vsyncpa [#allocation3], 0
    %9 = vsyncpa [#allocation4], 0
    // Predicated region
    $region2: #{emotion_classifier_forward.1} parent=1 // pred_check
      _
    $region3: #{emotion_classifier_forward.1} parent=1 // pred_check_branch
      %11 = sbr.rel (0) target = $region5
    $region4: #{emotion_classifier_forward.1} parent=1 // pred_region
      _
    $region5: #{emotion_classifier_forward.1} parent=1 // pred_fallthru
      _
    // Predicated region
    $region6: #{emotion_classifier_forward.1} parent=1 // pred_check
      _
    $region7: #{emotion_classifier_forward.1} parent=1 // pred_check_branch
      %13 = sbr.rel (0) target = $region9
    $region8: #{emotion_classifier_forward.1} parent=1 // pred_region
      %s15 = ssub.s32 256, 256
      %16 = vsyncadd [#allocation3], %s15
      %s17 = sshll.u32 [#allocation2], 4
      %s18 = int_to_ptr.vmem [resolvable:$true] %s17
      %23 = dma.hbm_to_vmem [thread:$0]  %s1, 256, %s18, [#allocation3], 64, 64, 4
    $region9: #{emotion_classifier_forward.1} parent=1 // pred_fallthru
      _
    // Predicated region
    $region10: #{emotion_classifier_forward.1} parent=1 // pred_check
      _
    $region11: #{emotion_classifier_forward.1} parent=1 // pred_check_branch
      %25 = sbr.rel (0) target = $region13
    $region12: #{emotion_classifier_forward.1} parent=1 // pred_region
      _
    $region13: #{emotion_classifier_forward.1} parent=1 // pred_fallthru
      _
    // Predicated region
    $region14: #{emotion_classifier_forward.1} parent=1 // pred_check
      _
    $region15: #{emotion_classifier_forward.1} parent=1 // pred_check_branch
      %27 = sbr.rel (0) target = $region17
    $region16: #{emotion_classifier_forward.1} parent=1 // pred_region
      %28 = dma.done [#allocation3], 256
    $region17: #{emotion_classifier_forward.1} parent=1 // pred_fallthru
      _
    %v30 = vld [vmem:[%s0] sm:$0xff]
    %v31 = vpack.c.bf16 %v30, %v30
    %v32 = vld [vmem:[#allocation2] sm:$0xf]
    %v33 = vld [vmem:[#allocation2 + $0x4] sm:$0xf]
    %v34 = vld [vmem:[#allocation2 + $0x8] sm:$0xf]
    %v35 = vld [vmem:[#allocation2 + $0xc] sm:$0xf]
    %v36 = vld [vmem:[%s2] sm:$0x1]
    %v38 = vlaneseq
    %v39 = vshrl.u32 %v38, 7
    %v40 = vsub.s32 0, %v39
    %v41 = vrot.slane %v36, %v40
    %v47 = vunpack.c.l.b16 %v32
    %v48 = vunpack.c.l.b16 %v33
    %v49 = vunpack.c.l.b16 %v34
    %v50 = vunpack.c.l.b16 %v35
    %v51 = vpack.c.b16 %v48, %v47
    %v52 = vpack.c.b16 %v50, %v49
    %vm55 = vcmask 261120
    %v57 = vsel %vm55, %v31, 0
    %59 = vmatprep.subr.bf16.mxu0 0
    %60 = vmatpush1.bf16.msra.mxu0 0
    %61 = vmatprep.subr.bf16.mxu0 0
    %62 = vmatpush1.bf16.msra.mxu0 0
    %63 = vmatprep.subr.bf16.mxu0 0
    %64 = vmatpush1.bf16.msra.mxu0 0
    %65 = vmatprep.subr.bf16.mxu0 0
    %66 = vmatpush1.bf16.msra.mxu0 0
    %67 = vmatprep.subr.bf16.mxu0 0
    %68 = vmatpush1.bf16.msra.mxu0 0
    %69 = vmatprep.subr.bf16.mxu0 0
    %70 = vmatpush1.bf16.msra.mxu0 0
    %71 = vmatprep.subr.bf16.mxu0 0
    %72 = vmatpush1.bf16.msra.mxu0 %v52
    %73 = vmatprep.subr.bf16.mxu0 0
    %74 = vmatpush1.bf16.msra.mxu0 %v51
    %75 = vmatprep.subr.bf16.mxu0 0
    %76 = vmatpush2.bf16.msra.mxu0 0
    %77 = vmatprep.subr.bf16.mxu0 0
    %78 = vmatpush2.bf16.msra.mxu0 0
    %79 = vmatprep.subr.bf16.mxu0 0
    %80 = vmatpush2.bf16.msra.mxu0 0
    %81 = vmatprep.subr.bf16.mxu0 0
    %82 = vmatpush2.bf16.msra.mxu0 0
    %83 = vmatprep.subr.bf16.mxu0 0
    %84 = vmatpush2.bf16.msra.mxu0 0
    %85 = vmatprep.subr.bf16.mxu0 0
    %86 = vmatpush2.bf16.msra.mxu0 0
    %87 = vmatprep.subr.bf16.mxu0 0
    %88 = vmatpush2.bf16.msra.mxu0 0
    %89 = vmatprep.subr.bf16.mxu0 0
    %90 = vmatpush2.bf16.msra.mxu0 0
    %91 = vmatprep.mubr.bf16.mxu0 0
    %92 = vmatmul.mubr.bf16.gmra.mxu0 %v57
    %v93 = vpop.f32.mrf.mxu0
    %v94 = vadd.f32 %v41, %v93
    %v95 = vpop.f32.mrf.mxu0
    %v96 = vpop.f32.mrf.mxu0
    %v97 = vpop.f32.mrf.mxu0
    %98 = vdwg.mxu0
    %99 = vst [vmem:[#allocation5] sm:$0xff] %v94
    // Predicated region
    $region18: #{emotion_classifier_forward.1} parent=1 // pred_check
      _
    $region19: #{emotion_classifier_forward.1} parent=1 // pred_check_branch
      %101 = sbr.rel (0) target = $region21
    $region20: #{emotion_classifier_forward.1} parent=1 // pred_region
      %s103 = ssub.s32 128, 32
      %104 = vsyncadd [#allocation4], %s103
      %s105 = sshll.u32 [#allocation5], 4
      %s106 = int_to_ptr.vmem [resolvable:$true] %s105
      %111 = dma.vmem_to_hbm [thread:$0]  %s106, 32, %s3, [#allocation4], 32, 32, 2
    $region21: #{emotion_classifier_forward.1} parent=1 // pred_fallthru
      _
    // Predicated region
    $region22: #{emotion_classifier_forward.1} parent=1 // pred_check
      _
    $region23: #{emotion_classifier_forward.1} parent=1 // pred_check_branch
      %113 = sbr.rel (0) target = $region25
    $region24: #{emotion_classifier_forward.1} parent=1 // pred_region
      %114 = dma.done [#allocation4], 128
    $region25: #{emotion_classifier_forward.1} parent=1 // pred_fallthru
      _
    %115 = vsyncpa [#allocation3], 1
    %116 = vsyncpa [#allocation4], 1

</llo_original>
